<compile_context>
chip_gen: v7x
topology: tpu7x:2x2x1
jax: 0.10.0
libtpu: 0.0.40
codegen_flags: <defaults>
</compile_context>

<pallas_src>
import jax
import jax.numpy as jnp
from jax.experimental import pallas as pl
from jax.experimental.pallas import tpu as pltpu


# Tile targets sized for the smallest-VMEM generation (v7x: 64 MiB physical,
# 32 MiB default scoped).  Double-buffered I/O tiles plus the f32 accumulator
# are only a few MiB at these values, leaving pipelining headroom on v5e/v6e.
_TM_TARGET = 256    # multiple of 8 (sublane) and of the 128/256 MXU granule
_TN_TARGET = 256    # multiple of 128 (lane), fills the 256-wide MXU on v6e/v7x
_TK_TARGET = 512    # multiple of 128 (lane of batch1 / sublane of batch2)

# Per-grid-step byte budget when packing multiple batches per step in the
# small-shape regime.
_SMALL_SLAB_BUDGET = 4 * 1024 * 1024


def _pick_tile(dim, target, granule):
    """Largest divisor of `dim` that is a multiple of `granule` and <= target.

    Falls back to the full dim (always a legal Pallas block extent) when the
    dim is already small enough or no suitable divisor exists."""
    if dim <= target:
        return dim
    best = None
    t = granule
    while t <= target:
        if dim % t == 0:
            best = t
        t += granule
    return best if best is not None else dim


def _baddbmm_tiled_kernel(inp_ref, b1_ref, b2_ref, out_ref, acc_ref):
    # Batch dim is squeezed out of every ref:
    #   b1_ref : (tm, tk)   b2_ref : (tk, tn)
    #   inp_ref / out_ref / acc_ref : (tm, tn)
    k = pl.program_id(3)

    @pl.when(k == 0)
    def _():
        # Seed the accumulator with the bias tile: fuses the epilogue add into
        # the init and avoids a separate zero-fill.
        acc_ref[...] = inp_ref[...].astype(jnp.float32)

    acc_ref[...] += jnp.dot(b1_ref[...], b2_ref[...],
                            preferred_element_type=jnp.float32)

    @pl.when(k == pl.num_programs(3) - 1)
    def _():
        out_ref[...] = acc_ref[...].astype(out_ref.dtype)


def _baddbmm_batched_kernel(inp_ref, b1_ref, b2_ref, out_ref):
    # Blocks: (Bt, M, K), (Bt, K, N), (Bt, M, N) — whole matrices, several
    # batches per grid step.
    acc = jnp.einsum("bmk,bkn->bmn", b1_ref[...], b2_ref[...],
                     preferred_element_type=jnp.float32)
    out_ref[...] = (acc + inp_ref[...].astype(jnp.float32)).astype(out_ref.dtype)


def baddbmm_pallas(inp, batch1, batch2):
    """bmm(batch1, batch2) + inp ; shapes (B,M,K) x (B,K,N) + (B,M,N)."""
    B, M, K = batch1.shape
    B2, K2, N = batch2.shape
    assert B == B2 and K == K2 and inp.shape == (B, M, N)

    itemsize = max(jnp.dtype(inp.dtype).itemsize,
                   jnp.dtype(batch1.dtype).itemsize,
                   jnp.dtype(batch2.dtype).itemsize)

    tm = _pick_tile(M, _TM_TARGET, 8)
    tn = _pick_tile(N, _TN_TARGET, 128)
    tk = _pick_tile(K, _TK_TARGET, 128)

    per_batch_bytes = (M * K + K * N + 2 * M * N) * itemsize

    if tm == M and tn == N and tk == K:
        # ---- Small-shape path: pack several batches into one grid step. ----
        bt = 1
        d = 1
        while d <= B:
            if B % d == 0 and d * per_batch_bytes <= _SMALL_SLAB_BUDGET:
                bt = d
            d += 1
        grid = (B // bt,)
        vmem_need = 2 * bt * per_batch_bytes + bt * M * N * 4

        return pl.pallas_call(
            _baddbmm_batched_kernel,
            out_shape=jax.ShapeDtypeStruct((B, M, N), inp.dtype),
            grid_spec=pltpu.PrefetchScalarGridSpec(
                num_scalar_prefetch=0,
                grid=grid,
                in_specs=[
                    pl.BlockSpec((bt, M, N), lambda b: (b, 0, 0)),  # bias
                    pl.BlockSpec((bt, M, K), lambda b: (b, 0, 0)),  # batch1
                    pl.BlockSpec((bt, K, N), lambda b: (b, 0, 0)),  # batch2
                ],
                out_specs=pl.BlockSpec((bt, M, N), lambda b: (b, 0, 0)),
            ),
            compiler_params=pltpu.CompilerParams(
                dimension_semantics=("parallel",),
                vmem_limit_bytes=max(32 * 1024 * 1024, int(1.5 * vmem_need)),
            ),
        )(inp, batch1, batch2)

    # ---- General tiled path: grid over (B, M-tiles, N-tiles, K-tiles). ----
    grid = (B, M // tm, N // tn, K // tk)

    tile_bytes = (tm * tk + tk * tn + 2 * tm * tn) * itemsize
    vmem_need = 2 * tile_bytes + tm * tn * 4      # double-buffered I/O + f32 acc
    vmem_limit = max(32 * 1024 * 1024, int(1.5 * vmem_need))

    return pl.pallas_call(
        _baddbmm_tiled_kernel,
        out_shape=jax.ShapeDtypeStruct((B, M, N), inp.dtype),
        grid_spec=pltpu.PrefetchScalarGridSpec(
            num_scalar_prefetch=0,
            grid=grid,
            in_specs=[
                # Bias block index ignores k -> the tile is DMA'd once per
                # (b,i,j) and stays resident in VMEM across the K reduction.
                pl.BlockSpec((pl.Squeezed(), tm, tn),
                             lambda b, i, j, k: (b, i, j)),
                pl.BlockSpec((pl.Squeezed(), tm, tk),
                             lambda b, i, j, k: (b, i, k)),
                pl.BlockSpec((pl.Squeezed(), tk, tn),
                             lambda b, i, j, k: (b, k, j)),
            ],
            out_specs=pl.BlockSpec((pl.Squeezed(), tm, tn),
                                   lambda b, i, j, k: (b, i, j)),
            scratch_shapes=[pltpu.VMEM((tm, tn), jnp.float32)],
        ),
        compiler_params=pltpu.CompilerParams(
            dimension_semantics=("parallel", "parallel", "parallel", "arbitrary"),
            vmem_limit_bytes=vmem_limit,
        ),
    )(inp, batch1, batch2)


if __name__ == "__main__":
    key = jax.random.PRNGKey(0)

    # --- Test 1: small shapes matching the module's demo (small-shape path). ---
    B, M, K, N = 2, 8, 32, 128
    k1, k2, k3, k4, k5, k6 = jax.random.split(key, 6)
    inp = jax.random.normal(k1, (B, M, N), dtype=jnp.float32)
    batch1 = jax.random.normal(k2, (B, M, K), dtype=jnp.float32)
    batch2 = jax.random.normal(k3, (B, K, N), dtype=jnp.float32)

    out = baddbmm_pallas(inp, batch1, batch2)
    jax.block_until_ready(out)
    ref = jnp.einsum("bmk,bkn->bmn", batch1, batch2) + inp
    assert out.shape == (B, M, N)
    assert jnp.allclose(out, ref, atol=1e-5, rtol=1e-5)

    # --- Test 2: exercise the general tiled path (N and K get tiled). ---
    B2_, M2_, K2_, N2_ = 2, 256, 640, 384
    inp2 = jax.random.normal(k4, (B2_, M2_, N2_), dtype=jnp.float32)
    b1_2 = jax.random.normal(k5, (B2_, M2_, K2_), dtype=jnp.float32)
    b2_2 = jax.random.normal(k6, (B2_, K2_, N2_), dtype=jnp.float32)

    out2 = baddbmm_pallas(inp2, b1_2, b2_2)
    jax.block_until_ready(out2)
    ref2 = jnp.einsum("bmk,bkn->bmn", b1_2, b2_2,
                      preferred_element_type=jnp.float32) + inp2
    assert out2.shape == (B2_, M2_, N2_)
    # Loose tolerance: accumulation-order / matmul-precision differences vs XLA.
    assert jnp.allclose(out2, ref2, atol=2e-2, rtol=2e-2)

    print("KERNEL_OK")
</pallas_src>

<mosaic_0001>
module attributes {stable_mosaic.version = 11 : i64} {
  func.func @_baddbmm_batched_kernel(%arg0: i32, %arg1: memref<2x8x128xf32, #tpu.memory_space<vmem>>, %arg2: memref<2x8x32xf32, #tpu.memory_space<vmem>>, %arg3: memref<2x32x128xf32, #tpu.memory_space<vmem>>, %arg4: memref<2x8x128xf32, #tpu.memory_space<vmem>>) attributes {dimension_semantics = [#tpu.dimension_semantics<parallel>], iteration_bounds = array<i64: 1>, scalar_prefetch = 0 : i64, scratch_operands = 0 : i64, tpu.core_type = #tpu.core_type<tc>, window_params = [{transform_indices = @transform_0, window_bounds = array<i64: 2, 8, 128>}, {transform_indices = @transform_1, window_bounds = array<i64: 2, 8, 32>}, {transform_indices = @transform_2, window_bounds = array<i64: 2, 32, 128>}, {transform_indices = @transform_3, window_bounds = array<i64: 2, 8, 128>}]} {
    %c0 = arith.constant 0 : index
    %c0_0 = arith.constant 0 : index
    %c0_1 = arith.constant 0 : index
    %0 = vector.load %arg2[%c0, %c0_0, %c0_1] : memref<2x8x32xf32, #tpu.memory_space<vmem>>, vector<2x8x32xf32>
    %c0_2 = arith.constant 0 : index
    %c0_3 = arith.constant 0 : index
    %c0_4 = arith.constant 0 : index
    %1 = vector.load %arg3[%c0_2, %c0_3, %c0_4] : memref<2x32x128xf32, #tpu.memory_space<vmem>>, vector<2x32x128xf32>
    "tpu.trace_start"() <{level = 10 : i32, message = "bmk,bkn->bmn"}> : () -> ()
    %cst = arith.constant dense<0.000000e+00> : vector<2x8x128xf32>
    %2 = tpu.matmul %0, %1, %cst {dimension_numbers = #tpu.dot_dimension_numbers<[2], [1], [1], [2], [0, 0, 0, 1, 1, 2], [0], [0]>} : vector<2x8x32xf32>, vector<2x32x128xf32>, vector<2x8x128xf32> -> vector<2x8x128xf32>
    "tpu.trace_stop"() : () -> ()
    %c0_5 = arith.constant 0 : index
    %c0_6 = arith.constant 0 : index
    %c0_7 = arith.constant 0 : index
    %3 = vector.load %arg1[%c0_5, %c0_6, %c0_7] : memref<2x8x128xf32, #tpu.memory_space<vmem>>, vector<2x8x128xf32>
    %4 = arith.addf %2, %3 : vector<2x8x128xf32>
    %c0_8 = arith.constant 0 : index
    %c0_9 = arith.constant 0 : index
    %c0_10 = arith.constant 0 : index
    %5 = vector.load %arg4[%c0_8, %c0_9, %c0_10] : memref<2x8x128xf32, #tpu.memory_space<vmem>>, vector<2x8x128xf32>
    tpu.vector_store %arg4[%c0_8, %c0_9, %c0_10], %4 {strides = array<i32>} : memref<2x8x128xf32, #tpu.memory_space<vmem>>, vector<2x8x128xf32>,
    return
  }
  func.func @transform_0(%arg0: i32) -> (i32, i32, i32) {
    %c0_i32 = arith.constant 0 : i32
    %c0_i32_0 = arith.constant 0 : i32
    %c0_i32_1 = arith.constant 0 : i32
    return %arg0, %c0_i32, %c0_i32_0 : i32, i32, i32
  }
  func.func @transform_1(%arg0: i32) -> (i32, i32, i32) {
    %c0_i32 = arith.constant 0 : i32
    %c0_i32_0 = arith.constant 0 : i32
    %c0_i32_1 = arith.constant 0 : i32
    return %arg0, %c0_i32, %c0_i32_0 : i32, i32, i32
  }
  func.func @transform_2(%arg0: i32) -> (i32, i32, i32) {
    %c0_i32 = arith.constant 0 : i32
    %c0_i32_0 = arith.constant 0 : i32
    %c0_i32_1 = arith.constant 0 : i32
    return %arg0, %c0_i32, %c0_i32_0 : i32, i32, i32
  }
  func.func @transform_3(%arg0: i32) -> (i32, i32, i32) {
    %c0_i32 = arith.constant 0 : i32
    %c0_i32_0 = arith.constant 0 : i32
    %c0_i32_1 = arith.constant 0 : i32
    return %arg0, %c0_i32, %c0_i32_0 : i32, i32, i32
  }
}

</mosaic_0001>

<llo_original>
// kernel: tpu_custom_call.1
$region0: #{tpu_custom_call.1}
  #allocation0 [shape = 'u32[]', space=smem, size = 0x4, offset = 0x4, fixed_abs, tag = 'smem constant byte address 0x4 - core index']
  #allocation1 [shape = 'u32[144,128]{1,0:T(1,128)}', space=vmem, size = 0x12000, scoped, tag = 'internal scratch']
  %s0 = inlined_call_operand.hbm [shape: f32[2,8,128], index: 0, kind: input, shape index: {}]
  %s1 = inlined_call_operand.hbm [shape: f32[2,8,32], index: 1, kind: input, shape index: {}]
  %s2 = inlined_call_operand.hbm [shape: f32[2,32,128], index: 2, kind: input, shape index: {}]
  %s3 = inlined_call_operand.hbm [shape: f32[2,8,128], index: 3, kind: output, shape index: {}]
  %s4 = sld [smem:[#allocation0]]
  $region34: #{tpu_custom_call.1} parent=0
    _
  %s6 = ssub.s32 1, %s4
  %s7 = scalar_select 0, %s6, %s4
  $region1: #{tpu_custom_call.1} parent=0
    #allocation2 [shape = 'u8[8192]{0}', space=vmem, size = 0x2000, scoped, tag = 'input window, operand 0, single buffered']
    #allocation3 [shape = 's32[1]{0}', space=sflag, size = 0x4, scoped, tag = 'scoped memory for tpu_custom_call.1']
    #allocation4 [shape = 's32[1]{0}', space=sflag, size = 0x4, scoped, tag = 'scoped memory for tpu_custom_call.1']
    #allocation5 [shape = 'u8[8192]{0}', space=vmem, size = 0x2000, scoped, tag = 'input window, operand 1, single buffered']
    #allocation6 [shape = 's32[1]{0}', space=sflag, size = 0x4, scoped, tag = 'scoped memory for tpu_custom_call.1']
    #allocation7 [shape = 'u8[32768]{0}', space=vmem, size = 0x8000, scoped, tag = 'input window, operand 2, single buffered']
    #allocation8 [shape = 'u8[8192]{0}', space=vmem, size = 0x2000, scoped, tag = 'output window, operand 0, single buffered']
    %8 = vsyncpa [#allocation3], 0
    %9 = vsyncpa [#allocation6], 0
    %10 = vsyncpa [#allocation4], 0
    // Predicated region
    $region2: #{tpu_custom_call.1} parent=1 // pred_check
      _
    $region3: #{tpu_custom_call.1} parent=1 // pred_check_branch
      %12 = sbr.rel (0) target = $region5
    $region4: #{tpu_custom_call.1} parent=1 // pred_region
      %s14 = ssub.s32 256, 256
      %15 = vsyncadd [#allocation3], %s14
      %s16 = sshll.u32 [#allocation2], 4
      %s17 = int_to_ptr.vmem [resolvable:$true] %s16
      %22 = dma.hbm_to_vmem [thread:$0]  %s0, 256, %s17, [#allocation3], 128, 128, 8
    $region5: #{tpu_custom_call.1} parent=1 // pred_fallthru
      _
    // Predicated region
    $region6: #{tpu_custom_call.1} parent=1 // pred_check
      _
    $region7: #{tpu_custom_call.1} parent=1 // pred_check_branch
      %24 = sbr.rel (0) target = $region9
    $region8: #{tpu_custom_call.1} parent=1 // pred_region
      %s26 = ssub.s32 256, 256
      %27 = vsyncadd [#allocation6], %s26
      %s28 = sshll.u32 [#allocation5], 4
      %s29 = int_to_ptr.vmem [resolvable:$true] %s28
      %34 = dma.hbm_to_vmem [thread:$0]  %s1, 256, %s29, [#allocation6], 128, 128, 8
    $region9: #{tpu_custom_call.1} parent=1 // pred_fallthru
      _
    // Predicated region
    $region10: #{tpu_custom_call.1} parent=1 // pred_check
      _
    $region11: #{tpu_custom_call.1} parent=1 // pred_check_branch
      %36 = sbr.rel (0) target = $region13
    $region12: #{tpu_custom_call.1} parent=1 // pred_region
      %s38 = ssub.s32 1024, 1024
      %39 = vsyncadd [#allocation6], %s38
      %s40 = sshll.u32 [#allocation7], 4
      %s41 = int_to_ptr.vmem [resolvable:$true] %s40
      %46 = dma.hbm_to_vmem [thread:$0]  %s2, 1024, %s41, [#allocation6], 128, 128, 8
    $region13: #{tpu_custom_call.1} parent=1 // pred_fallthru
      _
    // Predicated region
    $region14: #{tpu_custom_call.1} parent=1 // pred_check
      _
    $region15: #{tpu_custom_call.1} parent=1 // pred_check_branch
      %48 = sbr.rel (0) target = $region17
    $region16: #{tpu_custom_call.1} parent=1 // pred_region
      %49 = dma.done [#allocation3], 256
    $region17: #{tpu_custom_call.1} parent=1 // pred_fallthru
      _
    // Predicated region
    $region18: #{tpu_custom_call.1} parent=1 // pred_check
      _
    $region19: #{tpu_custom_call.1} parent=1 // pred_check_branch
      %51 = sbr.rel (0) target = $region21
    $region20: #{tpu_custom_call.1} parent=1 // pred_region
      %52 = dma.done [#allocation6], 256
    $region21: #{tpu_custom_call.1} parent=1 // pred_fallthru
      _
    // Predicated region
    $region22: #{tpu_custom_call.1} parent=1 // pred_check
      _
    $region23: #{tpu_custom_call.1} parent=1 // pred_check_branch
      %54 = sbr.rel (0) target = $region25
    $region24: #{tpu_custom_call.1} parent=1 // pred_region
      %55 = dma.done [#allocation6], 1024
    $region25: #{tpu_custom_call.1} parent=1 // pred_fallthru
      _
    %v56 = vld [vmem:[#allocation5] sm:$0xff]
    %v57 = vld [vmem:[#allocation5 + $0x8] sm:$0xff]
    %v58 = vld [vmem:[#allocation7] sm:$0xff]
    %v59 = vld [vmem:[#allocation7 + $0x8] sm:$0xff]
    %v60 = vld [vmem:[#allocation7 + $0x10] sm:$0xff]
    %v61 = vld [vmem:[#allocation7 + $0x18] sm:$0xff]
    %v62 = vld [vmem:[#allocation7 + $0x20] sm:$0xff]
    %v63 = vld [vmem:[#allocation7 + $0x28] sm:$0xff]
    %v64 = vld [vmem:[#allocation7 + $0x30] sm:$0xff]
    %v65 = vld [vmem:[#allocation7 + $0x38] sm:$0xff]
    %v66 = vld [vmem:[#allocation2] sm:$0xff]
    %v67 = vld [vmem:[#allocation2 + $0x8] sm:$0xff]
    %vm68 = vcmask 261120
    %v70 = vsel %vm68, %v56, 0
    %72 = vmatprep.subr.mxu0 0.0
    %73 = vmatpush1.msra.mxu0 %v58
    %74 = vmatprep.subr.mxu0 0.0
    %75 = vmatpush1.msra.mxu0 %v59
    %76 = vmatprep.subr.mxu0 0.0
    %77 = vmatpush1.msra.mxu0 %v60
    %78 = vmatprep.subr.mxu0 0.0
    %79 = vmatpush1.msra.mxu0 %v61
    %80 = vmatprep.subr.mxu0 0.0
    %81 = vmatpush1.msra.mxu0 0.0
    %82 = vmatprep.subr.mxu0 0.0
    %83 = vmatpush1.msra.mxu0 0.0
    %84 = vmatprep.subr.mxu0 0.0
    %85 = vmatpush1.msra.mxu0 0.0
    %86 = vmatprep.subr.mxu0 0.0
    %87 = vmatpush1.msra.mxu0 0.0
    %88 = vmatprep.subr.mxu0 0.0
    %89 = vmatpush1.msra.mxu0 0.0
    %90 = vmatprep.subr.mxu0 0.0
    %91 = vmatpush1.msra.mxu0 0.0
    %92 = vmatprep.subr.mxu0 0.0
    %93 = vmatpush1.msra.mxu0 0.0
    %94 = vmatprep.subr.mxu0 0.0
    %95 = vmatpush1.msra.mxu0 0.0
    %96 = vmatprep.subr.mxu0 0.0
    %97 = vmatpush1.msra.mxu0 0.0
    %98 = vmatprep.subr.mxu0 0.0
    %99 = vmatpush1.msra.mxu0 0.0
    %100 = vmatprep.subr.mxu0 0.0
    %101 = vmatpush1.msra.mxu0 0.0
    %102 = vmatprep.subr.mxu0 0.0
    %103 = vmatpush1.msra.mxu0 0.0
    %104 = vmatprep.subr.mxu0 0.0
    %105 = vmatpush1.msra.mxu0 0.0
    %106 = vmatprep.subr.mxu0 0.0
    %107 = vmatpush1.msra.mxu0 0.0
    %108 = vmatprep.subr.mxu0 0.0
    %109 = vmatpush1.msra.mxu0 0.0
    %110 = vmatprep.subr.mxu0 0.0
    %111 = vmatpush1.msra.mxu0 0.0
    %112 = vmatprep.subr.mxu0 0.0
    %113 = vmatpush1.msra.mxu0 0.0
    %114 = vmatprep.subr.mxu0 0.0
    %115 = vmatpush1.msra.mxu0 0.0
    %116 = vmatprep.subr.mxu0 0.0
    %117 = vmatpush1.msra.mxu0 0.0
    %118 = vmatprep.subr.mxu0 0.0
    %119 = vmatpush1.msra.mxu0 0.0
    %120 = vmatprep.subr.mxu0 0.0
    %121 = vmatpush1.msra.mxu0 0.0
    %122 = vmatprep.subr.mxu0 0.0
    %123 = vmatpush1.msra.mxu0 0.0
    %124 = vmatprep.subr.mxu0 0.0
    %125 = vmatpush1.msra.mxu0 0.0
    %126 = vmatprep.subr.mxu0 0.0
    %127 = vmatpush1.msra.mxu0 0.0
    %128 = vmatprep.subr.mxu0 0.0
    %129 = vmatpush1.msra.mxu0 0.0
    %130 = vmatprep.subr.mxu0 0.0
    %131 = vmatpush1.msra.mxu0 0.0
    %132 = vmatprep.subr.mxu0 0.0
    %133 = vmatpush1.msra.mxu0 0.0
    %134 = vmatprep.subr.mxu0 0.0
    %135 = vmatpush1.msra.mxu0 0.0
    %136 = vmatprep.mubr.f32.mxu0 0.0
    %137 = vmatmul.mubr.f32.gmra.mrb[0].mxu0 %v70
    %v138 = vpop.f32.mrb[0].mxu0
    %v139 = vadd.f32 %v66, %v138
    %v140 = vpop.f32.mrb[0].mxu0
    %141 = vdwg.mxu0
    %v143 = vsel %vm68, %v57, 0
    %145 = vmatprep.subr.mxu0 0.0
    %146 = vmatpush1.msra.mxu0 %v62
    %147 = vmatprep.subr.mxu0 0.0
    %148 = vmatpush1.msra.mxu0 %v63
    %149 = vmatprep.subr.mxu0 0.0
    %150 = vmatpush1.msra.mxu0 %v64
    %151 = vmatprep.subr.mxu0 0.0
    %152 = vmatpush1.msra.mxu0 %v65
    %153 = vmatprep.subr.mxu0 0.0
    %154 = vmatpush1.msra.mxu0 0.0
    %155 = vmatprep.subr.mxu0 0.0
    %156 = vmatpush1.msra.mxu0 0.0
    %157 = vmatprep.subr.mxu0 0.0
    %158 = vmatpush1.msra.mxu0 0.0
    %159 = vmatprep.subr.mxu0 0.0
    %160 = vmatpush1.msra.mxu0 0.0
    %161 = vmatprep.subr.mxu0 0.0
    %162 = vmatpush1.msra.mxu0 0.0
    %163 = vmatprep.subr.mxu0 0.0
    %164 = vmatpush1.msra.mxu0 0.0
    %165 = vmatprep.subr.mxu0 0.0
    %166 = vmatpush1.msra.mxu0 0.0
    %167 = vmatprep.subr.mxu0 0.0
    %168 = vmatpush1.msra.mxu0 0.0
    %169 = vmatprep.subr.mxu0 0.0
    %170 = vmatpush1.msra.mxu0 0.0
    %171 = vmatprep.subr.mxu0 0.0
    %172 = vmatpush1.msra.mxu0 0.0
    %173 = vmatprep.subr.mxu0 0.0
    %174 = vmatpush1.msra.mxu0 0.0
    %175 = vmatprep.subr.mxu0 0.0
    %176 = vmatpush1.msra.mxu0 0.0
    %177 = vmatprep.subr.mxu0 0.0
    %178 = vmatpush1.msra.mxu0 0.0
    %179 = vmatprep.subr.mxu0 0.0
    %180 = vmatpush1.msra.mxu0 0.0
    %181 = vmatprep.subr.mxu0 0.0
    %182 = vmatpush1.msra.mxu0 0.0
    %183 = vmatprep.subr.mxu0 0.0
    %184 = vmatpush1.msra.mxu0 0.0
    %185 = vmatprep.subr.mxu0 0.0
    %186 = vmatpush1.msra.mxu0 0.0
    %187 = vmatprep.subr.mxu0 0.0
    %188 = vmatpush1.msra.mxu0 0.0
    %189 = vmatprep.subr.mxu0 0.0
    %190 = vmatpush1.msra.mxu0 0.0
    %191 = vmatprep.subr.mxu0 0.0
    %192 = vmatpush1.msra.mxu0 0.0
    %193 = vmatprep.subr.mxu0 0.0
    %194 = vmatpush1.msra.mxu0 0.0
    %195 = vmatprep.subr.mxu0 0.0
    %196 = vmatpush1.msra.mxu0 0.0
    %197 = vmatprep.subr.mxu0 0.0
    %198 = vmatpush1.msra.mxu0 0.0
    %199 = vmatprep.subr.mxu0 0.0
    %200 = vmatpush1.msra.mxu0 0.0
    %201 = vmatprep.subr.mxu0 0.0
    %202 = vmatpush1.msra.mxu0 0.0
    %203 = vmatprep.subr.mxu0 0.0
    %204 = vmatpush1.msra.mxu0 0.0
    %205 = vmatprep.subr.mxu0 0.0
    %206 = vmatpush1.msra.mxu0 0.0
    %207 = vmatprep.subr.mxu0 0.0
    %208 = vmatpush1.msra.mxu0 0.0
    %209 = vmatprep.mubr.f32.mxu0 0.0
    %210 = vmatmul.mubr.f32.gmra.mrb[0].mxu0 %v143
    %v211 = vpop.f32.mrb[0].mxu0
    %v212 = vadd.f32 %v67, %v211
    %v213 = vpop.f32.mrb[0].mxu0
    %214 = vdwg.mxu0
    %215 = vst [vmem:[#allocation8] sm:$0xff] %v139
    %216 = vst [vmem:[#allocation8 + $0x8] sm:$0xff] %v212
    // Predicated region
    $region26: #{tpu_custom_call.1} parent=1 // pred_check
      _
    $region27: #{tpu_custom_call.1} parent=1 // pred_check_branch
      %218 = sbr.rel (0) target = $region29
    $region28: #{tpu_custom_call.1} parent=1 // pred_region
      %s220 = ssub.s32 256, 256
      %221 = vsyncadd [#allocation4], %s220
      %s222 = sshll.u32 [#allocation8], 4
      %s223 = int_to_ptr.vmem [resolvable:$true] %s222
      %228 = dma.vmem_to_hbm [thread:$0]  %s223, 256, %s3, [#allocation4], 128, 128, 8
    $region29: #{tpu_custom_call.1} parent=1 // pred_fallthru
      _
    // Predicated region
    $region30: #{tpu_custom_call.1} parent=1 // pred_check
      _
    $region31: #{tpu_custom_call.1} parent=1 // pred_check_branch
      %230 = sbr.rel (0) target = $region33
    $region32: #{tpu_custom_call.1} parent=1 // pred_region
      %231 = dma.done [#allocation4], 256
    $region33: #{tpu_custom_call.1} parent=1 // pred_fallthru
      _
    %232 = vsyncpa [#allocation3], 1
    %233 = vsyncpa [#allocation6], 1
    %234 = vsyncpa [#allocation4], 1

</llo_original>
